<compile_context>
chip_gen: v5e
topology: v5e:2x2
jax: 0.10.0
libtpu: 0.0.40
codegen_flags: <defaults>
</compile_context>

<pallas_src>
import jax
import jax.numpy as jnp
from jax.experimental import pallas as pl
from jax.experimental.pallas import tpu as pltpu


def _attention_kernel(g_ref, x_ref, wg_ref, wx_ref, bh_ref, wpsi_ref,
                      bpsi_ref, o_ref):
    # g_ref : (NB, Fg, TW)   x_ref : (NB, Fl, TW)   o_ref : (NB, Fl, TW)
    # wg    : (Fint, Fg)     wx    : (Fint, Fl)     bh    : (Fint, 1)
    # wpsi  : (1, Fint)      bpsi  : (1, 1)
    nb = g_ref.shape[0]
    for b in range(nb):                       # NB is small & static -> unrolled
        g = g_ref[b]                                        # (Fg, TW)
        x = x_ref[b]                                        # (Fl, TW)

        # fused g1 + x1 (BN folded into the weights); f32 accumulation
        h = jnp.dot(wg_ref[...], g, preferred_element_type=jnp.float32)
        h = h + jnp.dot(wx_ref[...], x, preferred_element_type=jnp.float32)
        h = jnp.maximum(h + bh_ref[...], 0.0)               # (Fint, TW)

        # psi = sigmoid(BN(Conv1x1(h)))  (Fint -> 1 channel)
        p = jnp.dot(wpsi_ref[...], h, preferred_element_type=jnp.float32)
        psi = jax.nn.sigmoid(p + bpsi_ref[...])             # (1, TW)

        # attention-gated output; psi broadcast over Fl channels (sublanes)
        o_ref[b] = (x.astype(jnp.float32) * psi).astype(o_ref.dtype)


def _fold_bn_into_conv(w, b, gamma, beta, mean, var, eps=1e-5):
    """Fold eval-mode BatchNorm into a 1x1 conv. w: (Cout, Cin), b: (Cout,)."""
    scale = gamma / jnp.sqrt(var + eps)
    w_f = w * scale[:, None]
    b_f = b * scale + beta - mean * scale
    return w_f.astype(jnp.float32), b_f.astype(jnp.float32)


def _pick_tiling(N, Fg, Fl, HWp, in_bytes, out_bytes, weight_bytes,
                 budget=40 * 1024 * 1024):
    """Choose (NB images per step, TW spatial tile) under a VMEM budget."""
    def resid(nb, tw):
        gx = nb * (Fg + Fl) * tw * in_bytes     # g block + x block
        ob = nb * Fl * tw * out_bytes           # output block
        # inputs/outputs double-buffered by the pipeline; weights also 2x
        return 2 * (gx + ob) + 2 * weight_bytes

    # spatial tile: largest multiple of 128 dividing HWp that fits the budget
    tw_cands = [t for t in range(min(HWp, 2048), 0, -128) if HWp % t == 0]
    if not tw_cands:
        tw_cands = [HWp]
    tw = tw_cands[-1]
    for t in tw_cands:
        if resid(1, t) <= budget:
            tw = t
            break

    n_spatial = HWp // tw
    nb = 1
    # deep U-Net stages: tiny blocks -> batch images per step to amortize the
    # per-grid-step overhead, but keep >=2 total grid steps for megacore.
    if resid(1, tw) < (2 << 20):
        for cand in (8, 4, 2):
            if N % cand != 0 or resid(cand, tw) > budget:
                continue
            if (N // cand) * n_spatial >= 2 or N * n_spatial < 2:
                nb = cand
                break
    return nb, tw, resid(nb, tw)


def attention_block_pallas(g, x, params):
    """g: (N, F_g, H, W), x: (N, F_l, H, W); returns x * psi (N, F_l, H, W)."""
    (wg, bg, bng), (wx, bx, bnx), (wpsi, bpsi, bnp) = params
    N, Fg, H, W = g.shape
    _, Fl, _, _ = x.shape
    Fint = wg.shape[0]
    HW = H * W
    HWp = -(-HW // 128) * 128                   # pad spatial to lane multiple
    out_dtype = x.dtype

    # (N, C, H, W) -> (N, C, H*W): spatial on the lane axis, no transposes,
    # native dtype (no f32 upcast of the bulk tensors).
    g2 = g.reshape(N, Fg, HW)
    x2 = x.reshape(N, Fl, HW)
    if HWp != HW:
        pad = ((0, 0), (0, 0), (0, HWp - HW))
        g2 = jnp.pad(g2, pad)
        x2 = jnp.pad(x2, pad)

    # Fold BN (+ conv bias) into the 1x1 conv weights (f32, tiny).
    wg_f, bg_f = _fold_bn_into_conv(wg[:, :, 0, 0].astype(jnp.float32),
                                    bg.astype(jnp.float32), *bng)
    wx_f, bx_f = _fold_bn_into_conv(wx[:, :, 0, 0].astype(jnp.float32),
                                    bx.astype(jnp.float32), *bnx)
    wp_f, bp_f = _fold_bn_into_conv(wpsi[:, :, 0, 0].astype(jnp.float32),
                                    bpsi.astype(jnp.float32), *bnp)
    bh = (bg_f + bx_f).reshape(Fint, 1)         # combined folded bias
    wpsi2 = wp_f.reshape(1, Fint)
    bpsi2 = bp_f.reshape(1, 1)

    in_bytes = jnp.dtype(g.dtype).itemsize
    out_bytes = jnp.dtype(out_dtype).itemsize
    weight_bytes = 4 * (Fint * (Fg + Fl) + Fint + Fint + 1)
    NB, TW, resid = _pick_tiling(N, Fg, Fl, HWp, in_bytes, out_bytes,
                                 weight_bytes)
    grid = (N // NB, HWp // TW)
    vmem_limit = int(min(max(resid + (8 << 20), 32 << 20), 48 << 20))

    out = pl.pallas_call(
        _attention_kernel,
        out_shape=jax.ShapeDtypeStruct((N, Fl, HWp), out_dtype),
        grid_spec=pltpu.PrefetchScalarGridSpec(
            num_scalar_prefetch=0,
            grid=grid,
            in_specs=[
                pl.BlockSpec((NB, Fg, TW), lambda n, t: (n, 0, t)),
                pl.BlockSpec((NB, Fl, TW), lambda n, t: (n, 0, t)),
                pl.BlockSpec((Fint, Fg), lambda n, t: (0, 0)),
                pl.BlockSpec((Fint, Fl), lambda n, t: (0, 0)),
                pl.BlockSpec((Fint, 1), lambda n, t: (0, 0)),
                pl.BlockSpec((1, Fint), lambda n, t: (0, 0)),
                pl.BlockSpec((1, 1), lambda n, t: (0, 0)),
            ],
            out_specs=pl.BlockSpec((NB, Fl, TW), lambda n, t: (n, 0, t)),
        ),
        compiler_params=pltpu.CompilerParams(
            dimension_semantics=("parallel", "parallel"),
            vmem_limit_bytes=vmem_limit),
    )(g2, x2, wg_f, wx_f, bh, wpsi2, bpsi2)

    if HWp != HW:
        out = out[:, :, :HW]
    return out.reshape(N, Fl, H, W)


# ---------------- pure-JAX reference (mirrors PyTorch eval forward) ----------
def attention_block_ref(g, x, params, eps=1e-5):
    (wg, bg, bng), (wx, bx, bnx), (wpsi, bpsi, bnp) = params

    def conv1x1(z, w, b):
        return (jnp.einsum('nchw,oc->nohw', z, w[:, :, 0, 0])
                + b[None, :, None, None])

    def bn(z, gamma, beta, mean, var):
        return (gamma[None, :, None, None]
                * (z - mean[None, :, None, None])
                / jnp.sqrt(var[None, :, None, None] + eps)
                + beta[None, :, None, None])

    g1 = bn(conv1x1(g, wg, bg), *bng)
    x1 = bn(conv1x1(x, wx, bx), *bnx)
    psi = jnp.maximum(g1 + x1, 0.0)
    psi = jax.nn.sigmoid(bn(conv1x1(psi, wpsi, bpsi), *bnp))
    return x * psi


if __name__ == "__main__":
    # Small shapes consistent with the module: F_g=F_l=4, F_int=8, 16x16 imgs.
    N, FG, FL, FINT, H, W = 2, 4, 4, 8, 16, 16
    key = jax.random.PRNGKey(0)
    ks = jax.random.split(key, 18)

    g = jax.random.normal(ks[0], (N, FG, H, W), jnp.float32)
    x = jax.random.normal(ks[1], (N, FL, H, W), jnp.float32)

    def make_bn(k0, k1, k2, k3, c):
        return (jax.random.normal(k0, (c,), jnp.float32) * 0.1 + 1.0,   # gamma
                jax.random.normal(k1, (c,), jnp.float32) * 0.1,          # beta
                jax.random.normal(k2, (c,), jnp.float32) * 0.1,          # mean
                jax.random.uniform(k3, (c,), jnp.float32, 0.5, 1.5))     # var

    # W_g : Conv1x1(F_g -> F_int) + BN(F_int)
    wg = jax.random.normal(ks[2], (FINT, FG, 1, 1), jnp.float32) * 0.2
    bg = jax.random.normal(ks[3], (FINT,), jnp.float32) * 0.1
    bng = make_bn(ks[4], ks[5], ks[6], ks[7], FINT)

    # W_x : Conv1x1(F_l -> F_int) + BN(F_int)
    wx = jax.random.normal(ks[8], (FINT, FL, 1, 1), jnp.float32) * 0.2
    bx = jax.random.normal(ks[9], (FINT,), jnp.float32) * 0.1
    bnx = make_bn(ks[10], ks[11], ks[12], ks[13], FINT)

    # psi : Conv1x1(F_int -> 1) + BN(1) + Sigmoid
    wpsi = jax.random.normal(ks[14], (1, FINT, 1, 1), jnp.float32) * 0.2
    bpsi = jax.random.normal(ks[15], (1,), jnp.float32) * 0.1
    bnp = make_bn(ks[16], ks[17], ks[0], ks[1], 1)

    params = ((wg, bg, bng), (wx, bx, bnx), (wpsi, bpsi, bnp))

    out = attention_block_pallas(g, x, params)
    out = jax.block_until_ready(out)

    ref = attention_block_ref(g, x, params)
    assert out.shape == (N, FL, H, W), out.shape
    assert jnp.allclose(out, ref, atol=1e-4, rtol=1e-4), (
        float(jnp.max(jnp.abs(out - ref))))

    print("KERNEL_OK")
</pallas_src>

<mosaic_0001>
module attributes {stable_mosaic.version = 11 : i64} {
  func.func @_attention_kernel(%arg0: i32, %arg1: i32, %arg2: memref<1x4x256xf32, #tpu.memory_space<vmem>>, %arg3: memref<1x4x256xf32, #tpu.memory_space<vmem>>, %arg4: memref<8x4xf32, #tpu.memory_space<vmem>>, %arg5: memref<8x4xf32, #tpu.memory_space<vmem>>, %arg6: memref<8x1xf32, #tpu.memory_space<vmem>>, %arg7: memref<1x8xf32, #tpu.memory_space<vmem>>, %arg8: memref<1x1xf32, #tpu.memory_space<vmem>>, %arg9: memref<1x4x256xf32, #tpu.memory_space<vmem>>) attributes {dimension_semantics = [#tpu.dimension_semantics<parallel>, #tpu.dimension_semantics<parallel>], iteration_bounds = array<i64: 2, 1>, scalar_prefetch = 0 : i64, scratch_operands = 0 : i64, tpu.core_type = #tpu.core_type<tc>, window_params = [{transform_indices = @transform_0, window_bounds = array<i64: 1, 4, 256>}, {transform_indices = @transform_1, window_bounds = array<i64: 1, 4, 256>}, {pipeline_mode = #tpu.pipeline_mode<synchronous>, transform_indices = @transform_2, window_bounds = array<i64: 8, 4>}, {pipeline_mode = #tpu.pipeline_mode<synchronous>, transform_indices = @transform_3, window_bounds = array<i64: 8, 4>}, {pipeline_mode = #tpu.pipeline_mode<synchronous>, transform_indices = @transform_4, window_bounds = array<i64: 8, 1>}, {pipeline_mode = #tpu.pipeline_mode<synchronous>, transform_indices = @transform_5, window_bounds = array<i64: 1, 8>}, {pipeline_mode = #tpu.pipeline_mode<synchronous>, transform_indices = @transform_6, window_bounds = array<i64: 1, 1>}, {transform_indices = @transform_7, window_bounds = array<i64: 1, 4, 256>}]} {
    %c0 = arith.constant 0 : index
    %c0_0 = arith.constant 0 : index
    %c0_1 = arith.constant 0 : index
    %0 = vector.load %arg2[%c0, %c0_0, %c0_1] : memref<1x4x256xf32, #tpu.memory_space<vmem>>, vector<1x4x256xf32>
    %1 = vector.shape_cast %0 : vector<1x4x256xf32> to vector<4x256xf32>
    %c0_2 = arith.constant 0 : index
    %c0_3 = arith.constant 0 : index
    %c0_4 = arith.constant 0 : index
    %2 = vector.load %arg3[%c0_2, %c0_3, %c0_4] : memref<1x4x256xf32, #tpu.memory_space<vmem>>, vector<1x4x256xf32>
    %3 = vector.shape_cast %2 : vector<1x4x256xf32> to vector<4x256xf32>
    %c0_5 = arith.constant 0 : index
    %c0_6 = arith.constant 0 : index
    %4 = vector.load %arg4[%c0_5, %c0_6] : memref<8x4xf32, #tpu.memory_space<vmem>>, vector<8x4xf32>
    %cst = arith.constant dense<0.000000e+00> : vector<8x256xf32>
    %5 = tpu.matmul %4, %1, %cst {dimension_numbers = #tpu.dot_dimension_numbers<[1], [0], [0], [1], [0, 0, 1, 1], [], []>} : vector<8x4xf32>, vector<4x256xf32>, vector<8x256xf32> -> vector<8x256xf32>
    %c0_7 = arith.constant 0 : index
    %c0_8 = arith.constant 0 : index
    %6 = vector.load %arg5[%c0_7, %c0_8] : memref<8x4xf32, #tpu.memory_space<vmem>>, vector<8x4xf32>
    %cst_9 = arith.constant dense<0.000000e+00> : vector<8x256xf32>
    %7 = tpu.matmul %6, %3, %cst_9 {dimension_numbers = #tpu.dot_dimension_numbers<[1], [0], [0], [1], [0, 0, 1, 1], [], []>} : vector<8x4xf32>, vector<4x256xf32>, vector<8x256xf32> -> vector<8x256xf32>
    %8 = arith.addf %5, %7 : vector<8x256xf32>
    %c0_10 = arith.constant 0 : index
    %c0_11 = arith.constant 0 : index
    %9 = vector.load %arg6[%c0_10, %c0_11] : memref<8x1xf32, #tpu.memory_space<vmem>>, vector<8x1xf32>
    %10 = vector.broadcast %9 : vector<8x1xf32> to vector<8x256xf32>
    %11 = arith.addf %8, %10 : vector<8x256xf32>
    %cst_12 = arith.constant 0.000000e+00 : f32
    %12 = vector.broadcast %cst_12 : f32 to vector<8x256xf32>
    %13 = arith.maximumf %11, %12 : vector<8x256xf32>
    %c0_13 = arith.constant 0 : index
    %c0_14 = arith.constant 0 : index
    %14 = vector.load %arg7[%c0_13, %c0_14] : memref<1x8xf32, #tpu.memory_space<vmem>>, vector<1x8xf32>
    %cst_15 = arith.constant dense<0.000000e+00> : vector<1x256xf32>
    %15 = tpu.matmul %14, %13, %cst_15 {dimension_numbers = #tpu.dot_dimension_numbers<[1], [0], [0], [1], [0, 0, 1, 1], [], []>} : vector<1x8xf32>, vector<8x256xf32>, vector<1x256xf32> -> vector<1x256xf32>
    %c0_16 = arith.constant 0 : index
    %c0_17 = arith.constant 0 : index
    %16 = vector.load %arg8[%c0_16, %c0_17] : memref<1x1xf32, #tpu.memory_space<vmem>>, vector<1x1xf32>
    %17 = vector.broadcast %16 : vector<1x1xf32> to vector<1x256xf32>
    %18 = arith.addf %15, %17 : vector<1x256xf32>
    %19 = arith.negf %18 : vector<1x256xf32>
    %20 = math.exp %19 : vector<1x256xf32>
    %cst_18 = arith.constant 1.000000e+00 : f32
    %21 = vector.broadcast %cst_18 : f32 to vector<1x256xf32>
    %22 = arith.addf %21, %20 : vector<1x256xf32>
    %23 = arith.divf %21, %22 : vector<1x256xf32>
    %24 = vector.broadcast %23 : vector<1x256xf32> to vector<4x256xf32>
    %25 = arith.mulf %3, %24 : vector<4x256xf32>
    %c0_19 = arith.constant 0 : index
    %c0_20 = arith.constant 0 : index
    %c0_21 = arith.constant 0 : index
    %26 = vector.load %arg9[%c0_19, %c0_20, %c0_21] : memref<1x4x256xf32, #tpu.memory_space<vmem>>, vector<1x4x256xf32>
    %27 = vector.shape_cast %26 : vector<1x4x256xf32> to vector<4x256xf32>
    %28 = vector.shape_cast %25 : vector<4x256xf32> to vector<1x4x256xf32>
    tpu.vector_store %arg9[%c0_19, %c0_20, %c0_21], %28 {strides = array<i32>} : memref<1x4x256xf32, #tpu.memory_space<vmem>>, vector<1x4x256xf32>,
    return
  }
  func.func @transform_0(%arg0: i32, %arg1: i32) -> (i32, i32, i32) {
    %c0_i32 = arith.constant 0 : i32
    %c0_i32_0 = arith.constant 0 : i32
    return %arg0, %c0_i32, %arg1 : i32, i32, i32
  }
  func.func @transform_1(%arg0: i32, %arg1: i32) -> (i32, i32, i32) {
    %c0_i32 = arith.constant 0 : i32
    %c0_i32_0 = arith.constant 0 : i32
    return %arg0, %c0_i32, %arg1 : i32, i32, i32
  }
  func.func @transform_2(%arg0: i32, %arg1: i32) -> (i32, i32) {
    %c0_i32 = arith.constant 0 : i32
    %c0_i32_0 = arith.constant 0 : i32
    %c0_i32_1 = arith.constant 0 : i32
    return %c0_i32, %c0_i32_0 : i32, i32
  }
  func.func @transform_3(%arg0: i32, %arg1: i32) -> (i32, i32) {
    %c0_i32 = arith.constant 0 : i32
    %c0_i32_0 = arith.constant 0 : i32
    %c0_i32_1 = arith.constant 0 : i32
    return %c0_i32, %c0_i32_0 : i32, i32
  }
  func.func @transform_4(%arg0: i32, %arg1: i32) -> (i32, i32) {
    %c0_i32 = arith.constant 0 : i32
    %c0_i32_0 = arith.constant 0 : i32
    %c0_i32_1 = arith.constant 0 : i32
    return %c0_i32, %c0_i32_0 : i32, i32
  }
  func.func @transform_5(%arg0: i32, %arg1: i32) -> (i32, i32) {
    %c0_i32 = arith.constant 0 : i32
    %c0_i32_0 = arith.constant 0 : i32
    %c0_i32_1 = arith.constant 0 : i32
    return %c0_i32, %c0_i32_0 : i32, i32
  }
  func.func @transform_6(%arg0: i32, %arg1: i32) -> (i32, i32) {
    %c0_i32 = arith.constant 0 : i32
    %c0_i32_0 = arith.constant 0 : i32
    %c0_i32_1 = arith.constant 0 : i32
    return %c0_i32, %c0_i32_0 : i32, i32
  }
  func.func @transform_7(%arg0: i32, %arg1: i32) -> (i32, i32, i32) {
    %c0_i32 = arith.constant 0 : i32
    %c0_i32_0 = arith.constant 0 : i32
    return %arg0, %c0_i32, %arg1 : i32, i32, i32
  }
}

</mosaic_0001>

<llo_original>
// kernel: tpu_custom_call.1
$region0: #{tpu_custom_call.1}
  #allocation0 [shape = 'u32[]', space=smem, size = 0x4, offset = 0x4, fixed_abs, tag = 'smem constant byte address 0x4 - core index']
  #allocation1 [shape = 'u32[72,128]{1,0:T(1,128)}', space=vmem, size = 0x9000, scoped, tag = 'internal scratch']
  #allocation2 [shape = 'f32[1,1]{1,0:T(1,128)S(1)}', space=vmem, size = 0x200, scoped, tag = 'scoped memory for tpu_custom_call.1']
  %s0 = inlined_call_operand.vmem [shape: f32[2,4,256], index: 0, kind: input, shape index: {}]
  %s1 = inlined_call_operand.hbm [shape: f32[2,4,256], index: 1, kind: input, shape index: {}]
  %s2 = inlined_call_operand.vmem [shape: f32[8,4], index: 2, kind: input, shape index: {}]
  %s3 = inlined_call_operand.vmem [shape: f32[8,4], index: 3, kind: input, shape index: {}]
  %s4 = inlined_call_operand.vmem [shape: f32[8,1], index: 4, kind: input, shape index: {}]
  %s5 = inlined_call_operand.vmem [shape: f32[1,8], index: 5, kind: input, shape index: {}]
  %s6 = inlined_call_operand.<no memory space> [shape: f32[1,1], index: 6, kind: input, shape index: {}]
  %s7 = inlined_call_operand.hbm [shape: f32[2,4,256], index: 7, kind: output, shape index: {}]
  %s8 = sld [smem:[#allocation0]]
  $region65: #{tpu_custom_call.1} parent=0
    _
  %s10 = ssub.s32 1, %s8
  %s11 = scalar_select 0, %s10, %s8
  %v12 = vstv %s6
  %13 = vst [vmem:[#allocation2] sm:$0x1] %v12
  $region1: #{tpu_custom_call.1} parent=0
    #allocation3 [shape = 'u8[8192]{0}', space=vmem, size = 0x2000, scoped, tag = 'input window, operand 1']
    #allocation4 [shape = 's32[2]{0}', space=sflag, size = 0x8, scoped, tag = 'scoped memory for tpu_custom_call.1']
    #allocation5 [shape = 's32[2]{0}', space=sflag, size = 0x8, scoped, tag = 'scoped memory for tpu_custom_call.1']
    #allocation6 [shape = 'u8[8192]{0}', space=vmem, size = 0x2000, scoped, tag = 'output window, operand 0']
    %14 = vsyncpa [#allocation4], 0
    %s15 = scalar_lea.sflag [#allocation4], 1
    %16 = vsyncpa %s15, 0
    %17 = vsyncpa [#allocation5], 0
    %s18 = scalar_lea.sflag [#allocation5], 1
    %19 = vsyncpa %s18, 0
    loop: start=0, step=1, limit=4
    $region2: #{tpu_custom_call.1} parent=1 // loop_pre_header
      _
    $region3: #{tpu_custom_call.1} parent=1 // loop_header
      %s21 = sphi 0, %s25
      %p22 = scmp.ge.s32.totalorder %s21, 4
      %s28 = sphi 0, %s40
      %s29 = sphi 0, %s36
      %s30 = sphi 0, %s28
      %s31 = sphi 0, %s29
      %s32 = sphi 0, %s30
      %s33 = sphi 0, %s31
      %s45 = sphi 0, %s47
      %s48 = sphi 0, %s45
      %s49 = sphi 0, %s48
      %s65 = sphi 0, %s49
      %s73 = sphi 0, %s75
      %s76 = sphi 0, %s73
      %s77 = sphi 0, %s76
      %s93 = sphi 0, %s77
      %s97 = sphi 0, %s97
      %s99 = sphi 0, %s97
      %s100 = sphi 0, %s99
      %s114 = sphi 0, %s100
      %s118 = sphi 0, %s118
      %s120 = sphi 0, %s118
      %s121 = sphi 0, %s120
      %s135 = sphi 0, %s121
      %s139 = sphi 0, %s139
      %s141 = sphi 0, %s139
      %s142 = sphi 0, %s141
      %s156 = sphi 0, %s142
      %s160 = sphi 0, %s160
      %s162 = sphi 0, %s160
      %s163 = sphi 0, %s162
      %s177 = sphi 0, %s163
      %s181 = sphi 0, %s181
      %s183 = sphi 0, %s181
      %s184 = sphi 0, %s183
      %s198 = sphi 0, %s184
      %s206 = sphi 0, %s208
      %s209 = sphi 0, %s206
      %s210 = sphi 0, %s209
      %s226 = sphi 0, %s210
    $region4: #{tpu_custom_call.1} parent=1 // loop_header_branch
      %24 = sbr.rel (%p22) target = $region8
    $region5: #{tpu_custom_call.1} parent=1 // loop_body
      %s26 = ssub.s32 %s21, 1
      %s27 = ssub.s32 %s21, 2
      %s34 = sadd.s32 1, %s29
      %p35 = scmp.ge.s32.totalorder %s34, 1
      %s36 = scalar_select %p35, 0, %s34
      %s37 = sadd.s32 1, %s28
      %s38 = scalar_select %p35, %s37, %s28
      %p39 = scmp.ge.s32.totalorder %s38, 2
      %s40 = scalar_select %p39, 0, %s38
      %s41 = ssub.s32 %s28, %s40
      %s42 = ssub.s32 %s29, %s36
      %s43 = sor.u32 %s41, %s42
      %p44 = scmp.eq.s32.totalorder %s43, 0
      %s46 = sadd.s32 %s45, 1
      %s47 = scalar_select %p44, %s45, %s46
      %p50 = pneg %p44
      %p51 = scmp.eq.s32.totalorder %s21, 1
      %p52 = por %p50, %p51
      %p53 = scmp.ne.s32.totalorder %s45, %s48
      %p54 = scmp.eq.s32.totalorder %s21, 0
      %p55 = por %p53, %p54
      %p56 = scmp.ne.s32.totalorder %s45, %s48
      %p57 = scmp.eq.s32.totalorder %s26, 1
      %p58 = por %p56, %p57
      %p59 = scmp.ne.s32.totalorder %s48, %s49
      %p60 = scmp.eq.s32.totalorder %s26, 0
      %p61 = por %p59, %p60
      %p62 = scmp.ne.s32.totalorder %s48, %s49
      %p63 = scmp.eq.s32.totalorder %s27, 1
      %p64 = por %p62, %p63
      %p66 = scmp.ne.s32.totalorder %s49, %s65
      %p67 = scmp.eq.s32.totalorder %s27, 0
      %p68 = por %p66, %p67
      %s69 = ssub.s32 %s28, %s40
      %s70 = ssub.s32 %s29, %s36
      %s71 = sor.u32 %s69, %s70
      %p72 = scmp.eq.s32.totalorder %s71, 0
      %s74 = sadd.s32 %s73, 1
      %s75 = scalar_select %p72, %s73, %s74
      %p78 = pneg %p72
      %p79 = scmp.eq.s32.totalorder %s21, 1
      %p80 = por %p78, %p79
      %p81 = scmp.ne.s32.totalorder %s73, %s76
      %p82 = scmp.eq.s32.totalorder %s21, 0
      %p83 = por %p81, %p82
      %p84 = scmp.ne.s32.totalorder %s73, %s76
      %p85 = scmp.eq.s32.totalorder %s26, 1
      %p86 = por %p84, %p85
      %p87 = scmp.ne.s32.totalorder %s76, %s77
      %p88 = scmp.eq.s32.totalorder %s26, 0
      %p89 = por %p87, %p88
      %p90 = scmp.ne.s32.totalorder %s76, %s77
      %p91 = scmp.eq.s32.totalorder %s27, 1
      %p92 = por %p90, %p91
      %p94 = scmp.ne.s32.totalorder %s77, %s93
      %p95 = scmp.eq.s32.totalorder %s27, 0
      %p96 = por %p94, %p95
      %s98 = sadd.s32 %s97, 1
      %p101 = scmp.eq.s32.totalorder %s21, 1
      %p102 = scmp.ne.s32.totalorder %s97, %s99
      %p103 = scmp.eq.s32.totalorder %s21, 0
      %p104 = por %p102, %p103
      %p105 = scmp.ne.s32.totalorder %s97, %s99
      %p106 = scmp.eq.s32.totalorder %s26, 1
      %p107 = por %p105, %p106
      %p108 = scmp.ne.s32.totalorder %s99, %s100
      %p109 = scmp.eq.s32.totalorder %s26, 0
      %p110 = por %p108, %p109
      %p111 = scmp.ne.s32.totalorder %s99, %s100
      %p112 = scmp.eq.s32.totalorder %s27, 1
      %p113 = por %p111, %p112
      %p115 = scmp.ne.s32.totalorder %s100, %s114
      %p116 = scmp.eq.s32.totalorder %s27, 0
      %p117 = por %p115, %p116
      %s119 = sadd.s32 %s118, 1
      %p122 = scmp.eq.s32.totalorder %s21, 1
      %p123 = scmp.ne.s32.totalorder %s118, %s120
      %p124 = scmp.eq.s32.totalorder %s21, 0
      %p125 = por %p123, %p124
      %p126 = scmp.ne.s32.totalorder %s118, %s120
      %p127 = scmp.eq.s32.totalorder %s26, 1
      %p128 = por %p126, %p127
      %p129 = scmp.ne.s32.totalorder %s120, %s121
      %p130 = scmp.eq.s32.totalorder %s26, 0
      %p131 = por %p129, %p130
      %p132 = scmp.ne.s32.totalorder %s120, %s121
      %p133 = scmp.eq.s32.totalorder %s27, 1
      %p134 = por %p132, %p133
      %p136 = scmp.ne.s32.totalorder %s121, %s135
      %p137 = scmp.eq.s32.totalorder %s27, 0
      %p138 = por %p136, %p137
      %s140 = sadd.s32 %s139, 1
      %p143 = scmp.eq.s32.totalorder %s21, 1
      %p144 = scmp.ne.s32.totalorder %s139, %s141
      %p145 = scmp.eq.s32.totalorder %s21, 0
      %p146 = por %p144, %p145
      %p147 = scmp.ne.s32.totalorder %s139, %s141
      %p148 = scmp.eq.s32.totalorder %s26, 1
      %p149 = por %p147, %p148
      %p150 = scmp.ne.s32.totalorder %s141, %s142
      %p151 = scmp.eq.s32.totalorder %s26, 0
      %p152 = por %p150, %p151
      %p153 = scmp.ne.s32.totalorder %s141, %s142
      %p154 = scmp.eq.s32.totalorder %s27, 1
      %p155 = por %p153, %p154
      %p157 = scmp.ne.s32.totalorder %s142, %s156
      %p158 = scmp.eq.s32.totalorder %s27, 0
      %p159 = por %p157, %p158
      %s161 = sadd.s32 %s160, 1
      %p164 = scmp.eq.s32.totalorder %s21, 1
      %p165 = scmp.ne.s32.totalorder %s160, %s162
      %p166 = scmp.eq.s32.totalorder %s21, 0
      %p167 = por %p165, %p166
      %p168 = scmp.ne.s32.totalorder %s160, %s162
      %p169 = scmp.eq.s32.totalorder %s26, 1
      %p170 = por %p168, %p169
      %p171 = scmp.ne.s32.totalorder %s162, %s163
      %p172 = scmp.eq.s32.totalorder %s26, 0
      %p173 = por %p171, %p172
      %p174 = scmp.ne.s32.totalorder %s162, %s163
      %p175 = scmp.eq.s32.totalorder %s27, 1
      %p176 = por %p174, %p175
      %p178 = scmp.ne.s32.totalorder %s163, %s177
      %p179 = scmp.eq.s32.totalorder %s27, 0
      %p180 = por %p178, %p179
      %s182 = sadd.s32 %s181, 1
      %p185 = scmp.eq.s32.totalorder %s21, 1
      %p186 = scmp.ne.s32.totalorder %s181, %s183
      %p187 = scmp.eq.s32.totalorder %s21, 0
      %p188 = por %p186, %p187
      %p189 = scmp.ne.s32.totalorder %s181, %s183
      %p190 = scmp.eq.s32.totalorder %s26, 1
      %p191 = por %p189, %p190
      %p192 = scmp.ne.s32.totalorder %s183, %s184
      %p193 = scmp.eq.s32.totalorder %s26, 0
      %p194 = por %p192, %p193
      %p195 = scmp.ne.s32.totalorder %s183, %s184
      %p196 = scmp.eq.s32.totalorder %s27, 1
      %p197 = por %p195, %p196
      %p199 = scmp.ne.s32.totalorder %s184, %s198
      %p200 = scmp.eq.s32.totalorder %s27, 0
      %p201 = por %p199, %p200
      %s202 = ssub.s32 %s28, %s40
      %s203 = ssub.s32 %s29, %s36
      %s204 = sor.u32 %s202, %s203
      %p205 = scmp.eq.s32.totalorder %s204, 0
      %s207 = sadd.s32 %s206, 1
      %s208 = scalar_select %p205, %s206, %s207
      %p211 = pneg %p205
      %p212 = scmp.eq.s32.totalorder %s21, 1
      %p213 = por %p211, %p212
      %p214 = scmp.ne.s32.totalorder %s206, %s209
      %p215 = scmp.eq.s32.totalorder %s21, 0
      %p216 = por %p214, %p215
      %p217 = scmp.ne.s32.totalorder %s206, %s209
      %p218 = scmp.eq.s32.totalorder %s26, 1
      %p219 = por %p217, %p218
      %p220 = scmp.ne.s32.totalorder %s209, %s210
      %p221 = scmp.eq.s32.totalorder %s26, 0
      %p222 = por %p220, %p221
      %p223 = scmp.ne.s32.totalorder %s209, %s210
      %p224 = scmp.eq.s32.totalorder %s27, 1
      %p225 = por %p223, %p224
      %p227 = scmp.ne.s32.totalorder %s210, %s226
      %p228 = scmp.eq.s32.totalorder %s27, 0
      %p229 = por %p227, %p228
      %p230 = scmp.le.s32.totalorder 1, %s21
      %p231 = scmp.lt.s32.totalorder %s21, 3
      %p232 = pnand %p230, %p231
      %p233 = pneg %p232
      // Predicated region
      $region9: #{tpu_custom_call.1} parent=5 // pred_check
        _
      $region10: #{tpu_custom_call.1} parent=5 // pred_check_branch
        %235 = sbr.rel (%p232) target = $region12
      $region11: #{tpu_custom_call.1} parent=5 // pred_region
        %s236 = ssub.s32 %s21, 1
        // Predicated region
        $region13: #{tpu_custom_call.1} parent=11 // pred_check
          %p237 = pneg %p110
        $region14: #{tpu_custom_call.1} parent=11 // pred_check_branch
          %239 = sbr.rel (%p237) target = $region16
        $region15: #{tpu_custom_call.1} parent=11 // pred_region
          _
        $region16: #{tpu_custom_call.1} parent=11 // pred_fallthru
          _
        // Predicated region
        $region17: #{tpu_custom_call.1} parent=11 // pred_check
          %p240 = pneg %p131
        $region18: #{tpu_custom_call.1} parent=11 // pred_check_branch
          %242 = sbr.rel (%p240) target = $region20
        $region19: #{tpu_custom_call.1} parent=11 // pred_region
          _
        $region20: #{tpu_custom_call.1} parent=11 // pred_fallthru
          _
        // Predicated region
        $region21: #{tpu_custom_call.1} parent=11 // pred_check
          %p243 = pneg %p152
        $region22: #{tpu_custom_call.1} parent=11 // pred_check_branch
          %245 = sbr.rel (%p243) target = $region24
        $region23: #{tpu_custom_call.1} parent=11 // pred_region
          _
        $region24: #{tpu_custom_call.1} parent=11 // pred_fallthru
          _
        // Predicated region
        $region25: #{tpu_custom_call.1} parent=11 // pred_check
          %p246 = pneg %p173
        $region26: #{tpu_custom_call.1} parent=11 // pred_check_branch
          %248 = sbr.rel (%p246) target = $region28
        $region27: #{tpu_custom_call.1} parent=11 // pred_region
          _
        $region28: #{tpu_custom_call.1} parent=11 // pred_fallthru
          _
        // Predicated region
        $region29: #{tpu_custom_call.1} parent=11 // pred_check
          %p249 = pneg %p194
        $region30: #{tpu_custom_call.1} parent=11 // pred_check_branch
          %251 = sbr.rel (%p249) target = $region32
        $region31: #{tpu_custom_call.1} parent=11 // pred_region
          _
        $region32: #{tpu_custom_call.1} parent=11 // pred_fallthru
          _
      $region12: #{tpu_custom_call.1} parent=5 // pred_fallthru
        _
      %p252 = scmp.lt.s32.totalorder %s21, 2
      // Predicated region
      $region33: #{tpu_custom_call.1} parent=5 // pred_check
        %p253 = pneg %p252
      $region34: #{tpu_custom_call.1} parent=5 // pred_check_branch
        %255 = sbr.rel (%p253) target = $region36
      $region35: #{tpu_custom_call.1} parent=5 // pred_region
        // Predicated region
        $region37: #{tpu_custom_call.1} parent=35 // pred_check
          %p256 = pneg %p55
        $region38: #{tpu_custom_call.1} parent=35 // pred_check_branch
          %258 = sbr.rel (%p256) target = $region40
        $region39: #{tpu_custom_call.1} parent=35 // pred_region
          %s259 = smul.u32 2, %s29
          %p260 = scmp.lt.s32.totalorder %s28, 1
          %s261 = scalar_select %p260, %s28, 1
          %p262 = scmp.lt.s32.totalorder %s259, 1
          %s263 = scalar_select %p262, %s259, 1
          %s264 = smul.addr %s261, 2
          %s265 = sadd.s32 %s263, %s264
          %s266 = smul.addr %s265, 4
          %s267 = scalar_lea.vmem %s0, %s266
          %s268 = smul.u32 2, %s29
        $region40: #{tpu_custom_call.1} parent=35 // pred_fallthru
          _
        // Predicated region
        $region41: #{tpu_custom_call.1} parent=35 // pred_check
          %p269 = pneg %p83
        $region42: #{tpu_custom_call.1} parent=35 // pred_check_branch
          %271 = sbr.rel (%p269) target = $region44
        $region43: #{tpu_custom_call.1} parent=35 // pred_region
          %s272 = sand.u32 %s73, 1
          %s273 = scalar_lea.sflag [#allocation4], %s272
          %s274 = sand.u32 %s73, 1
          %s275 = smul.addr %s274, 8
          %s276 = scalar_lea.vmem [#allocation3], %s275
          %s277 = smul.u32 2, %s29
          %279 = vsyncadd %s273, 0
          %s280 = smul.addr %s28, 2
          %s281 = sadd.s32 %s277, %s280
          %s282 = smul.addr %s281, 4
          %s283 = scalar_lea.hbm %s1, %s282
          %s285 = sshll.u32 %s283, 4
          %s286 = int_to_ptr.hbm [resolvable:$true] %s285
          %s287 = sshll.u32 %s276, 4
          %s288 = int_to_ptr.vmem [resolvable:$true] %s287
          %290 = dma.hbm_to_vmem [thread:$0]  %s286, 128, %s288, %s273
        $region44: #{tpu_custom_call.1} parent=35 // pred_fallthru
          _
      $region36: #{tpu_custom_call.1} parent=5 // pred_fallthru
        _
      %p291 = scmp.le.s32.totalorder 1, %s21
      %p292 = scmp.lt.s32.totalorder %s21, 3
      %p293 = pnand %p291, %p292
      %p294 = pneg %p293
      // Predicated region
      $region45: #{tpu_custom_call.1} parent=5 // pred_check
        _
      $region46: #{tpu_custom_call.1} parent=5 // pred_check_branch
        %296 = sbr.rel (%p293) target = $region48
      $region47: #{tpu_custom_call.1} parent=5 // pred_region
        %s297 = ssub.s32 %s21, 1
        %s298 = sand.u32 %s76, 1
        %s299 = scalar_lea.sflag [#allocation4], %s298
        %s300 = sand.u32 %s76, 1
        %s301 = smul.addr %s300, 8
        %s302 = scalar_lea.vmem [#allocation3], %s301
        // Predicated region
        $region49: #{tpu_custom_call.1} parent=47 // pred_check
          %p303 = pneg %p89
        $region50: #{tpu_custom_call.1} parent=47 // pred_check_branch
          %305 = sbr.rel (%p303) target = $region52
        $region51: #{tpu_custom_call.1} parent=47 // pred_region
          %307 = dma.done %s299, 128
        $region52: #{tpu_custom_call.1} parent=47 // pred_fallthru
          _
        %s308 = smul.u32 2, %s31
        %p309 = scmp.lt.s32.totalorder %s30, 1
        %s310 = scalar_select %p309, %s30, 1
        %p311 = scmp.lt.s32.totalorder %s308, 1
        %s312 = scalar_select %p311, %s308, 1
        %s313 = smul.addr %s310, 2
        %s314 = sadd.s32 %s312, %s313
        %s315 = smul.addr %s314, 4
        %s316 = scalar_lea.vmem %s0, %s315
        %p317 = pneg %p61
        %p318 = pneg %p58
        %s319 = sand.u32 %s76, 1
        %s320 = scalar_lea.sflag [#allocation4], %s319
        %s321 = sand.u32 %s76, 1
        %s322 = smul.addr %s321, 8
        %s323 = scalar_lea.vmem [#allocation3], %s322
        %p324 = pneg %p89
        %p325 = pneg %p86
        %p326 = pneg %p110
        %p327 = pneg %p107
        %p328 = pneg %p131
        %p329 = pneg %p128
        %p330 = pneg %p152
        %p331 = pneg %p149
        %p332 = pneg %p173
        %p333 = pneg %p170
        %p334 = pneg %p194
        %p335 = pneg %p191
        %p336 = pneg %p222
        %p337 = pneg %p219
        %s338 = sand.u32 %s209, 1
        %s339 = scalar_lea.sflag [#allocation5], %s338
        %s340 = sand.u32 %s209, 1
        %s341 = smul.addr %s340, 8
        %s342 = scalar_lea.vmem [#allocation6], %s341
        %s343 = smul.u32 2, %s31
        %p344 = scmp.lt.s32.totalorder %s30, 1
        %s345 = scalar_select %p344, %s30, 1
        %p346 = scmp.lt.s32.totalorder %s343, 1
        %s347 = scalar_select %p346, %s343, 1
        %s348 = smul.addr %s345, 2
        %s349 = sadd.s32 %s347, %s348
        %s350 = smul.addr %s349, 4
        %s351 = scalar_lea.vmem %s0, %s350
        %s352 = smul.u32 2, %s31
        %s353 = smul.u32 2, %s31
        %s354 = smul.u32 2, %s31
        %v355 = vld [vmem:[%s351] sm:$0xff]
        %v356 = vld [vmem:[%s302] sm:$0xff]
        %v357 = vld [vmem:[%s2] sm:$0xff]
        %v358 = vld [vmem:[%s3] sm:$0xff]
        %360 = vst [vmem:[#allocation1] ss:$2 sm:$0xff] %v356
        %v361 = vld.sshfl [vmem:[#allocation1] sm:$0xff pattern:$0x75316420]
        %v362 = vld.sshfl [vmem:[#allocation1 + $0x8] sm:$0xff pattern:$0x75316420]
        %vm363 = vcmask 31744
        %v365 = vsel %vm363, %v358, 0
        %vm367 = vcmask 1043456
        %v368 = vsel %vm367, %v361, 0
        %v370 = vsel %vm367, %v362, 0
        %372 = vmatpush.msra.mxu0 0.0
        %373 = vmatpush.msra.mxu0 0.0
        %374 = vmatpush.msra.mxu0 0.0
        %375 = vmatpush.msra.mxu0 0.0
        %376 = vmatpush.msra.mxu0 0.0
        %377 = vmatpush.msra.mxu0 0.0
        %378 = vmatpush.msra.mxu0 0.0
        %379 = vmatpush.msra.mxu0 0.0
        %380 = vmatpush.msra.mxu0 0.0
        %381 = vmatpush.msra.mxu0 0.0
        %382 = vmatpush.msra.mxu0 0.0
        %383 = vmatpush.msra.mxu0 0.0
        %384 = vmatpush.msra.mxu0 0.0
        %385 = vmatpush.msra.mxu0 0.0
        %386 = vmatpush.msra.mxu0 0.0
        %387 = vmatpush.msra.mxu0 %v368
        %388 = vmatmul.f32.gmra.mxu0 %v365
        %v389 = vpop.f32.mrf.mxu0
        %v390 = vadd.f32 0.0, %v389
        %391 = vdwg.mxu0
        %392 = vmatpush.msra.mxu0 0.0
        %393 = vmatpush.msra.mxu0 0.0
        %394 = vmatpush.msra.mxu0 0.0
        %395 = vmatpush.msra.mxu0 0.0
        %396 = vmatpush.msra.mxu0 0.0
        %397 = vmatpush.msra.mxu0 0.0
        %398 = vmatpush.msra.mxu0 0.0
        %399 = vmatpush.msra.mxu0 0.0
        %400 = vmatpush.msra.mxu0 0.0
        %401 = vmatpush.msra.mxu0 0.0
        %402 = vmatpush.msra.mxu0 0.0
        %403 = vmatpush.msra.mxu0 0.0
        %404 = vmatpush.msra.mxu0 0.0
        %405 = vmatpush.msra.mxu0 0.0
        %406 = vmatpush.msra.mxu0 0.0
        %407 = vmatpush.msra.mxu0 %v370
        %408 = vmatmul.f32.gmra.mxu0 %v365
        %v409 = vpop.f32.mrf.mxu0
        %v410 = vadd.f32 0.0, %v409
        %411 = vdwg.mxu0
        %413 = vst [vmem:[#allocation1] ss:$2 sm:$0xff] %v355
        %v414 = vld.sshfl [vmem:[#allocation1] sm:$0xff pattern:$0x75316420]
        %v415 = vld.sshfl [vmem:[#allocation1 + $0x8] sm:$0xff pattern:$0x75316420]
        %v417 = vsel %vm363, %v357, 0
        %v419 = vsel %vm367, %v414, 0
        %v421 = vsel %vm367, %v415, 0
        %423 = vmatpush.msra.mxu0 0.0
        %424 = vmatpush.msra.mxu0 0.0
        %425 = vmatpush.msra.mxu0 0.0
        %426 = vmatpush.msra.mxu0 0.0
        %427 = vmatpush.msra.mxu0 0.0
        %428 = vmatpush.msra.mxu0 0.0
        %429 = vmatpush.msra.mxu0 0.0
        %430 = vmatpush.msra.mxu0 0.0
        %431 = vmatpush.msra.mxu0 0.0
        %432 = vmatpush.msra.mxu0 0.0
        %433 = vmatpush.msra.mxu0 0.0
        %434 = vmatpush.msra.mxu0 0.0
        %435 = vmatpush.msra.mxu0 0.0
        %436 = vmatpush.msra.mxu0 0.0
        %437 = vmatpush.msra.mxu0 0.0
        %438 = vmatpush.msra.mxu0 %v419
        %439 = vmatmul.f32.gmra.mxu0 %v417
        %v440 = vpop.f32.mrf.mxu0
        %v441 = vadd.f32 %v390, %v440
        %442 = vdwg.mxu0
        %443 = vmatpush.msra.mxu0 0.0
        %444 = vmatpush.msra.mxu0 0.0
        %445 = vmatpush.msra.mxu0 0.0
        %446 = vmatpush.msra.mxu0 0.0
        %447 = vmatpush.msra.mxu0 0.0
        %448 = vmatpush.msra.mxu0 0.0
        %449 = vmatpush.msra.mxu0 0.0
        %450 = vmatpush.msra.mxu0 0.0
        %451 = vmatpush.msra.mxu0 0.0
        %452 = vmatpush.msra.mxu0 0.0
        %453 = vmatpush.msra.mxu0 0.0
        %454 = vmatpush.msra.mxu0 0.0
        %455 = vmatpush.msra.mxu0 0.0
        %456 = vmatpush.msra.mxu0 0.0
        %457 = vmatpush.msra.mxu0 0.0
        %458 = vmatpush.msra.mxu0 %v421
        %459 = vmatmul.f32.gmra.mxu0 %v417
        %v460 = vpop.f32.mrf.mxu0
        %v461 = vadd.f32 %v410, %v460
        %462 = vdwg.mxu0
        %v463 = vld [vmem:[%s4] sm:$0xff]
        %465 = vset.pattern.permute.xlu0 0
        %466 = vperm.xlu0 %465, %v463
        %v467 = vpop.permute.xlu0 %466
        %v469 = vadd.f32 %v441, %v467
        %v470 = vadd.f32 %v461, %v467
        %v471 = vmax.f32 %v469, 0.0
        %v472 = vmax.f32 %v470, 0.0
        %v473 = vld [vmem:[%s5] sm:$0x1]
        %v474 = vld [vmem:[#allocation2] sm:$0x1]
        %476 = vset.pattern.permute.xlu0 0
        %477 = vperm.xlu0 %476, %v474
        %v478 = vpop.permute.xlu0 %477
        %v480 = vperm.slane %v478, 0
        %vm481 = vcmask 64512
        %v483 = vsel %vm481, %v473, 0
        %485 = vmatpush.msra.mxu0 0.0
        %486 = vmatpush.msra.mxu0 0.0
        %487 = vmatpush.msra.mxu0 0.0
        %488 = vmatpush.msra.mxu0 0.0
        %489 = vmatpush.msra.mxu0 0.0
        %490 = vmatpush.msra.mxu0 0.0
        %491 = vmatpush.msra.mxu0 0.0
        %492 = vmatpush.msra.mxu0 0.0
        %493 = vmatpush.msra.mxu0 0.0
        %494 = vmatpush.msra.mxu0 0.0
        %495 = vmatpush.msra.mxu0 0.0
        %496 = vmatpush.msra.mxu0 0.0
        %497 = vmatpush.msra.mxu0 0.0
        %498 = vmatpush.msra.mxu0 0.0
        %499 = vmatpush.msra.mxu0 0.0
        %500 = vmatpush.msra.mxu0 %v471
        %501 = vmatmul.f32.gmra.mxu0 %v483
        %v502 = vpop.f32.mrf.mxu0
        %v503 = vadd.f32 %v480, %v502
        %504 = vdwg.mxu0
        %505 = vmatpush.msra.mxu0 0.0
        %506 = vmatpush.msra.mxu0 0.0
        %507 = vmatpush.msra.mxu0 0.0
        %508 = vmatpush.msra.mxu0 0.0
        %509 = vmatpush.msra.mxu0 0.0
        %510 = vmatpush.msra.mxu0 0.0
        %511 = vmatpush.msra.mxu0 0.0
        %512 = vmatpush.msra.mxu0 0.0
        %513 = vmatpush.msra.mxu0 0.0
        %514 = vmatpush.msra.mxu0 0.0
        %515 = vmatpush.msra.mxu0 0.0
        %516 = vmatpush.msra.mxu0 0.0
        %517 = vmatpush.msra.mxu0 0.0
        %518 = vmatpush.msra.mxu0 0.0
        %519 = vmatpush.msra.mxu0 0.0
        %520 = vmatpush.msra.mxu0 %v472
        %521 = vmatmul.f32.gmra.mxu0 %v483
        %v522 = vpop.f32.mrf.mxu0
        %v523 = vadd.f32 %v480, %v522
        %524 = vdwg.mxu0
        %v525 = vxor.u32 %v503, 2147483648
        %v526 = vxor.u32 %v523, 2147483648
        %v527 = vmul.f32 %v525, 1.442695
        %v528 = vpow.pop %v527
        %v529 = vmul.f32 %v526, 1.442695
        %v530 = vpow.pop %v529
        %v531 = vadd.f32 %v528, 1.0
        %v532 = vadd.f32 %v530, 1.0
        %v533 = vrcp.pop %v531
        %v534 = vmul.f32 %v531, %v533
        %v535 = vsub.f32 1.0, %v534
        %v536 = vmul.f32 %v533, %v535
        %v537 = vadd.f32 %v533, %v536
        %vm538 = vweird.f32 %v531
        %vm539 = vweird.f32 %v533
        %vm540 = vmor %vm538, %vm539
        %v541 = vsel %vm540, %v533, %v537
        %v542 = vand.u32 2147483647, %v531
        %vm543 = vcmp.eq.f32.partialorder %v542, 8.507059e+37
        %v544 = vand.u32 %v531, 2147483648
        %v545 = vor.u32 1.1754944e-38, %v544
        %v546 = vsel %vm543, %v545, %v541
        %v547 = vmul.f32 1.0, %v546
        %v548 = vrcp.pop %v532
        %v549 = vmul.f32 %v532, %v548
        %v550 = vsub.f32 1.0, %v549
        %v551 = vmul.f32 %v548, %v550
        %v552 = vadd.f32 %v548, %v551
        %vm553 = vweird.f32 %v532
        %vm554 = vweird.f32 %v548
        %vm555 = vmor %vm553, %vm554
        %v556 = vsel %vm555, %v548, %v552
        %v557 = vand.u32 2147483647, %v532
        %vm558 = vcmp.eq.f32.partialorder %v557, 8.507059e+37
        %v559 = vand.u32 %v532, 2147483648
        %v560 = vor.u32 1.1754944e-38, %v559
        %v561 = vsel %vm558, %v560, %v556
        %v562 = vmul.f32 1.0, %v561
        %v563 = vperm.slane %v547, 0
        %v564 = vperm.slane %v562, 0
        %v567 = vrot.slane %v564, 4
        %v568 = vsel %vm367, %v563, %v567
        %v570 = vmul.f32 %v356, %v568
        %571 = vst [vmem:[%s342] sm:$0xff] %v570
        %s572 = sand.u32 %s209, 1
        %s573 = scalar_lea.sflag [#allocation5], %s572
        %s574 = sand.u32 %s209, 1
        %s575 = smul.addr %s574, 8
        %s576 = scalar_lea.vmem [#allocation6], %s575
        // Predicated region
        $region53: #{tpu_custom_call.1} parent=47 // pred_check
          %p577 = pneg %p219
        $region54: #{tpu_custom_call.1} parent=47 // pred_check_branch
          %579 = sbr.rel (%p577) target = $region56
        $region55: #{tpu_custom_call.1} parent=47 // pred_region
          %s580 = smul.u32 2, %s31
          %582 = vsyncadd %s573, 0
          %s583 = smul.addr %s30, 2
          %s584 = sadd.s32 %s580, %s583
          %s585 = smul.addr %s584, 4
          %s586 = scalar_lea.hbm %s7, %s585
          %s588 = sshll.u32 %s576, 4
          %s589 = int_to_ptr.vmem [resolvable:$true] %s588
          %s590 = sshll.u32 %s586, 4
          %s591 = int_to_ptr.hbm [resolvable:$true] %s590
          %593 = dma.vmem_to_hbm [thread:$0]  %s589, 128, %s591, %s573
        $region56: #{tpu_custom_call.1} parent=47 // pred_fallthru
          _
      $region48: #{tpu_custom_call.1} parent=5 // pred_fallthru
        _
      %p594 = scmp.le.s32.totalorder 2, %s21
      // Predicated region
      $region57: #{tpu_custom_call.1} parent=5 // pred_check
        %p595 = pneg %p594
      $region58: #{tpu_custom_call.1} parent=5 // pred_check_branch
        %597 = sbr.rel (%p595) target = $region60
      $region59: #{tpu_custom_call.1} parent=5 // pred_region
        %s598 = ssub.s32 %s21, 2
        // Predicated region
        $region61: #{tpu_custom_call.1} parent=59 // pred_check
          %p599 = pneg %p225
        $region62: #{tpu_custom_call.1} parent=59 // pred_check_branch
          %601 = sbr.rel (%p599) target = $region64
        $region63: #{tpu_custom_call.1} parent=59 // pred_region
          %s602 = sand.u32 %s210, 1
          %s603 = scalar_lea.sflag [#allocation5], %s602
          %s604 = sand.u32 %s210, 1
          %s605 = smul.addr %s604, 8
          %s606 = scalar_lea.vmem [#allocation6], %s605
          %608 = dma.done %s603, 128
        $region64: #{tpu_custom_call.1} parent=59 // pred_fallthru
          _
      $region60: #{tpu_custom_call.1} parent=5 // pred_fallthru
        _
    $region6: #{tpu_custom_call.1} parent=1 // loop_footer
      %s25 = sadd.s32 1, %s21
    $region7: #{tpu_custom_call.1} parent=1 // loop_footer_branch
      %20 = sbr.rel target = $region3
    $region8: #{tpu_custom_call.1} parent=1 // loop_exit
      _
    %609 = vsyncpa [#allocation4], 1
    %s610 = scalar_lea.sflag [#allocation4], 1
    %611 = vsyncpa %s610, 1
    %612 = vsyncpa [#allocation5], 1
    %s613 = scalar_lea.sflag [#allocation5], 1
    %614 = vsyncpa %s613, 1

</llo_original>
